<compile_context>
chip_gen: v7x
topology: tpu7x:2x2x1
jax: 0.10.0
libtpu: 0.0.40
codegen_flags: <defaults>
</compile_context>

<pallas_src>
import functools

import jax
import jax.numpy as jnp
from jax.experimental import pallas as pl
from jax.experimental.pallas import tpu as pltpu


def _mlp_kernel(*refs, num_layers):
    # refs = (x_ref, w_ref_0, ..., w_ref_{L-1}, o_ref)
    #   x_ref  : (C0, tm)        bf16; channels on sublanes, pixels on lanes
    #   w_ref_i: (C_out, C_in)   bf16; native torch 1x1-conv weight layout
    #   o_ref  : (C_last, tm)    output dtype (lane-dense store)
    x_ref = refs[0]
    w_refs = refs[1:1 + num_layers]
    o_ref = refs[1 + num_layers]

    h = x_ref[...]                                   # bf16 operand
    for li, w_ref in enumerate(w_refs):
        acc = jnp.dot(w_ref[...], h,                 # (C_out, tm) f32 accumulate
                      preferred_element_type=jnp.float32)
        acc = jnp.maximum(acc, 0.0)                  # ReLU after every conv
        # bf16 operand for the next MXU pass; keep the last layer in f32.
        h = acc.astype(jnp.bfloat16) if li + 1 < num_layers else acc
    o_ref[...] = h.astype(o_ref.dtype)


def _choose_row_tile(m):
    """Lane-axis tile for the flattened pixel dim.

    Multiple of 128 -> unmasked, lane-dense stores.  Prefer 512-1024 rows
    (>=85% of HBM roofline per measured sweeps) but keep >= 4 grid steps when
    possible so the 'parallel' axis can shard across TensorCores (v7x) and the
    pipeline has DMA/compute overlap.  Capped at 1024 for v7x's 64 MiB VMEM.
    """
    m128 = ((max(m, 1) + 127) // 128) * 128
    for tm in (1024, 512, 256, 128):
        if m128 // tm >= 4:
            return tm
    if m128 // 128 >= 2:
        return (m128 // 128 // 2) * 128
    return 128


def mlp_forward(x, weights):
    """Forward pass of MLP(ch_list) on an NCHW input.

    x:       (N, C0, H, W)
    weights: list of (C_{i+1}, C_i) arrays (squeezed 1x1-conv kernels, no bias)
    returns: (N, C_last, H, W)
    """
    if len(weights) == 0:
        # len(ch_list) < 2 -> empty nn.Sequential -> identity
        return x

    N, C0, H, W = x.shape
    M = N * H * W
    C_last = int(weights[-1].shape[0])

    # Channels-first flatten: (C0, M).  Pixels go on the lane axis.
    x_cm = jnp.transpose(x, (1, 0, 2, 3)).reshape(C0, M)

    # bf16 operands for the MXU (accumulation stays f32 inside the kernel).
    x_bf = x_cm.astype(jnp.bfloat16)
    w_bf = [w.astype(jnp.bfloat16) for w in weights]     # native (C_out, C_in)

    tm = _choose_row_tile(M)
    M_pad = ((M + tm - 1) // tm) * tm
    if M_pad != M:
        # Zero padding is harmless: bias-free matmul + ReLU maps zeros to zeros.
        x_bf = jnp.pad(x_bf, ((0, 0), (0, M_pad - M)))

    grid = (M_pad // tm,)
    num_layers = len(w_bf)
    kernel = functools.partial(_mlp_kernel, num_layers=num_layers)

    # VMEM budget estimate -> scoped limit (kept <= 48 MiB so it is safe under
    # v7x's 64 MiB physical VMEM; >= 32 MiB so v5e's 16 MiB default is raised).
    bf16_b, f32_b = 2, 4
    max_c = max([C0] + [int(w.shape[0]) for w in weights])
    est = (2 * tm * C0 * bf16_b                                   # input tile x2
           + 2 * tm * C_last * f32_b                              # output tile x2
           + 2 * sum(int(w.size) for w in w_bf) * bf16_b          # weights x2
           + 2 * tm * max_c * f32_b)                              # f32 intermediates
    vmem_limit = int(min(48 * 2**20, max(32 * 2**20, 2 * est)))

    out_cm = pl.pallas_call(
        kernel,
        out_shape=jax.ShapeDtypeStruct((C_last, M_pad), x.dtype),
        grid=grid,
        in_specs=[pl.BlockSpec((C0, tm), lambda i: (0, i))]
                + [pl.BlockSpec(w.shape, lambda i: (0, 0)) for w in w_bf],
        out_specs=pl.BlockSpec((C_last, tm), lambda i: (0, i)),
        compiler_params=pltpu.CompilerParams(
            dimension_semantics=("parallel",),
            vmem_limit_bytes=vmem_limit,
        ),
    )(x_bf, *w_bf)

    out_cm = out_cm[:, :M]
    return jnp.transpose(out_cm.reshape(C_last, N, H, W), (1, 0, 2, 3))


if __name__ == "__main__":
    key = jax.random.PRNGKey(0)
    ch_list = [4, 32, 16]          # MLP([4, 32, 16]): two 1x1 convs, ReLU after each
    N, H, W = 2, 16, 16

    kx, *kws = jax.random.split(key, len(ch_list))
    x = jax.random.normal(kx, (N, ch_list[0], H, W), dtype=jnp.float32)
    weights = [
        jax.random.normal(kws[i], (ch_list[i + 1], ch_list[i]), dtype=jnp.float32)
        * (1.0 / jnp.sqrt(ch_list[i]))
        for i in range(len(ch_list) - 1)
    ]

    out = mlp_forward(x, weights)
    jax.block_until_ready(out)

    # Pure-JAX reference mirroring the kernel's bf16-operand / f32-accumulate
    # numerics (bias-free 1x1 conv == channel matmul, ReLU after every conv).
    ref = x
    for w in weights:
        ref = jnp.einsum(
            'oc,nchw->nohw',
            w.astype(jnp.bfloat16).astype(jnp.float32),
            ref.astype(jnp.bfloat16).astype(jnp.float32))
        ref = jnp.maximum(ref, 0.0)

    assert out.shape == (N, ch_list[-1], H, W), out.shape
    assert out.dtype == x.dtype
    assert jnp.allclose(out, ref, atol=2e-3, rtol=2e-3), \
        float(jnp.max(jnp.abs(out - ref)))

    print("KERNEL_OK")
</pallas_src>

<mosaic_0001>
module attributes {stable_mosaic.version = 11 : i64} {
  func.func @_mlp_kernel(%arg0: i32, %arg1: memref<4x128xbf16, #tpu.memory_space<vmem>>, %arg2: memref<32x4xbf16, #tpu.memory_space<vmem>>, %arg3: memref<16x32xbf16, #tpu.memory_space<vmem>>, %arg4: memref<16x128xf32, #tpu.memory_space<vmem>>) attributes {dimension_semantics = [#tpu.dimension_semantics<parallel>], iteration_bounds = array<i64: 4>, scalar_prefetch = 0 : i64, scratch_operands = 0 : i64, tpu.core_type = #tpu.core_type<tc>, window_params = [{transform_indices = @transform_0, window_bounds = array<i64: 4, 128>}, {pipeline_mode = #tpu.pipeline_mode<synchronous>, transform_indices = @transform_1, window_bounds = array<i64: 32, 4>}, {pipeline_mode = #tpu.pipeline_mode<synchronous>, transform_indices = @transform_2, window_bounds = array<i64: 16, 32>}, {transform_indices = @transform_3, window_bounds = array<i64: 16, 128>}]} {
    %c0 = arith.constant 0 : index
    %c0_0 = arith.constant 0 : index
    %0 = vector.load %arg1[%c0, %c0_0] : memref<4x128xbf16, #tpu.memory_space<vmem>>, vector<4x128xbf16>
    %c0_1 = arith.constant 0 : index
    %c0_2 = arith.constant 0 : index
    %1 = vector.load %arg2[%c0_1, %c0_2] : memref<32x4xbf16, #tpu.memory_space<vmem>>, vector<32x4xbf16>
    %cst = arith.constant dense<0.000000e+00> : vector<32x128xf32>
    %2 = tpu.matmul %1, %0, %cst {dimension_numbers = #tpu.dot_dimension_numbers<[1], [0], [0], [1], [0, 0, 1, 1], [], []>} : vector<32x4xbf16>, vector<4x128xbf16>, vector<32x128xf32> -> vector<32x128xf32>
    %cst_3 = arith.constant 0.000000e+00 : f32
    %3 = vector.broadcast %cst_3 : f32 to vector<32x128xf32>
    %4 = arith.maximumf %2, %3 : vector<32x128xf32>
    %5 = arith.truncf %4 : vector<32x128xf32> to vector<32x128xbf16>
    %c0_4 = arith.constant 0 : index
    %c0_5 = arith.constant 0 : index
    %6 = vector.load %arg3[%c0_4, %c0_5] : memref<16x32xbf16, #tpu.memory_space<vmem>>, vector<16x32xbf16>
    %cst_6 = arith.constant dense<0.000000e+00> : vector<16x128xf32>
    %7 = tpu.matmul %6, %5, %cst_6 {dimension_numbers = #tpu.dot_dimension_numbers<[1], [0], [0], [1], [0, 0, 1, 1], [], []>} : vector<16x32xbf16>, vector<32x128xbf16>, vector<16x128xf32> -> vector<16x128xf32>
    %cst_7 = arith.constant 0.000000e+00 : f32
    %8 = vector.broadcast %cst_7 : f32 to vector<16x128xf32>
    %9 = arith.maximumf %7, %8 : vector<16x128xf32>
    %c0_8 = arith.constant 0 : index
    %c0_9 = arith.constant 0 : index
    %10 = vector.load %arg4[%c0_8, %c0_9] : memref<16x128xf32, #tpu.memory_space<vmem>>, vector<16x128xf32>
    tpu.vector_store %arg4[%c0_8, %c0_9], %9 {strides = array<i32>} : memref<16x128xf32, #tpu.memory_space<vmem>>, vector<16x128xf32>,
    return
  }
  func.func @transform_0(%arg0: i32) -> (i32, i32) {
    %c0_i32 = arith.constant 0 : i32
    %c0_i32_0 = arith.constant 0 : i32
    return %c0_i32, %arg0 : i32, i32
  }
  func.func @transform_1(%arg0: i32) -> (i32, i32) {
    %c0_i32 = arith.constant 0 : i32
    %c0_i32_0 = arith.constant 0 : i32
    %c0_i32_1 = arith.constant 0 : i32
    return %c0_i32, %c0_i32_0 : i32, i32
  }
  func.func @transform_2(%arg0: i32) -> (i32, i32) {
    %c0_i32 = arith.constant 0 : i32
    %c0_i32_0 = arith.constant 0 : i32
    %c0_i32_1 = arith.constant 0 : i32
    return %c0_i32, %c0_i32_0 : i32, i32
  }
  func.func @transform_3(%arg0: i32) -> (i32, i32) {
    %c0_i32 = arith.constant 0 : i32
    %c0_i32_0 = arith.constant 0 : i32
    return %c0_i32, %arg0 : i32, i32
  }
}

</mosaic_0001>

<llo_original>
// kernel: tpu_custom_call.1
$region0: #{tpu_custom_call.1}
  #allocation0 [shape = 'u32[]', space=smem, size = 0x4, offset = 0x4, fixed_abs, tag = 'smem constant byte address 0x4 - core index']
  #allocation1 [shape = 'u32[144,128]{1,0:T(1,128)}', space=vmem, size = 0x12000, scoped, tag = 'internal scratch']
  %s0 = inlined_call_operand.vmem [shape: bf16[4,512], index: 0, kind: input, shape index: {}]
  %s1 = inlined_call_operand.vmem [shape: bf16[32,4], index: 1, kind: input, shape index: {}]
  %s2 = inlined_call_operand.vmem [shape: bf16[16,32], index: 2, kind: input, shape index: {}]
  %s3 = inlined_call_operand.hbm [shape: f32[16,512], index: 3, kind: output, shape index: {}]
  %s4 = sld [smem:[#allocation0]]
  $region45: #{tpu_custom_call.1} parent=0
    _
  %s6 = ssub.s32 1, %s4
  %s7 = scalar_select 0, %s6, %s4
  $region1: #{tpu_custom_call.1} parent=0
    #allocation2 [shape = 'u8[16384]{0}', space=vmem, size = 0x4000, scoped, tag = 'output window, operand 0']
    #allocation3 [shape = 's32[2]{0}', space=sflag, size = 0x8, scoped, tag = 'scoped memory for tpu_custom_call.1']
    %8 = vsyncpa [#allocation3], 0
    %s9 = scalar_lea.sflag [#allocation3], 1
    %10 = vsyncpa %s9, 0
    loop: start=0, step=1, limit=6
    $region2: #{tpu_custom_call.1} parent=1 // loop_pre_header
      _
    $region3: #{tpu_custom_call.1} parent=1 // loop_header
      %s12 = sphi 0, %s16
      %p13 = scmp.ge.s32.totalorder %s12, 6
      %s22 = sphi 0, %s24
      %s25 = sphi 0, %s22
      %s26 = sphi 0, %s25
      %s42 = sphi 0, %s26
      %s46 = sphi 0, %s46
      %s48 = sphi 0, %s46
      %s49 = sphi 0, %s48
      %s63 = sphi 0, %s49
      %s67 = sphi 0, %s67
      %s69 = sphi 0, %s67
      %s70 = sphi 0, %s69
      %s84 = sphi 0, %s70
      %s90 = sphi 0, %s92
      %s93 = sphi 0, %s90
      %s94 = sphi 0, %s93
      %s110 = sphi 0, %s94
    $region4: #{tpu_custom_call.1} parent=1 // loop_header_branch
      %15 = sbr.rel (%p13) target = $region8
    $region5: #{tpu_custom_call.1} parent=1 // loop_body
      %s17 = ssub.s32 %s12, 1
      %s18 = ssub.s32 %s12, 2
      %s19 = sadd.s32 %s12, 1
      %s20 = ssub.s32 %s12, %s19
      %p21 = scmp.eq.s32.totalorder %s20, 0
      %s23 = sadd.s32 %s22, 1
      %s24 = scalar_select %p21, %s22, %s23
      %p27 = pneg %p21
      %p28 = scmp.eq.s32.totalorder %s12, 3
      %p29 = por %p27, %p28
      %p30 = scmp.ne.s32.totalorder %s22, %s25
      %p31 = scmp.eq.s32.totalorder %s12, 0
      %p32 = por %p30, %p31
      %p33 = scmp.ne.s32.totalorder %s22, %s25
      %p34 = scmp.eq.s32.totalorder %s17, 3
      %p35 = por %p33, %p34
      %p36 = scmp.ne.s32.totalorder %s25, %s26
      %p37 = scmp.eq.s32.totalorder %s17, 0
      %p38 = por %p36, %p37
      %p39 = scmp.ne.s32.totalorder %s25, %s26
      %p40 = scmp.eq.s32.totalorder %s18, 3
      %p41 = por %p39, %p40
      %p43 = scmp.ne.s32.totalorder %s26, %s42
      %p44 = scmp.eq.s32.totalorder %s18, 0
      %p45 = por %p43, %p44
      %s47 = sadd.s32 %s46, 1
      %p50 = scmp.eq.s32.totalorder %s12, 3
      %p51 = scmp.ne.s32.totalorder %s46, %s48
      %p52 = scmp.eq.s32.totalorder %s12, 0
      %p53 = por %p51, %p52
      %p54 = scmp.ne.s32.totalorder %s46, %s48
      %p55 = scmp.eq.s32.totalorder %s17, 3
      %p56 = por %p54, %p55
      %p57 = scmp.ne.s32.totalorder %s48, %s49
      %p58 = scmp.eq.s32.totalorder %s17, 0
      %p59 = por %p57, %p58
      %p60 = scmp.ne.s32.totalorder %s48, %s49
      %p61 = scmp.eq.s32.totalorder %s18, 3
      %p62 = por %p60, %p61
      %p64 = scmp.ne.s32.totalorder %s49, %s63
      %p65 = scmp.eq.s32.totalorder %s18, 0
      %p66 = por %p64, %p65
      %s68 = sadd.s32 %s67, 1
      %p71 = scmp.eq.s32.totalorder %s12, 3
      %p72 = scmp.ne.s32.totalorder %s67, %s69
      %p73 = scmp.eq.s32.totalorder %s12, 0
      %p74 = por %p72, %p73
      %p75 = scmp.ne.s32.totalorder %s67, %s69
      %p76 = scmp.eq.s32.totalorder %s17, 3
      %p77 = por %p75, %p76
      %p78 = scmp.ne.s32.totalorder %s69, %s70
      %p79 = scmp.eq.s32.totalorder %s17, 0
      %p80 = por %p78, %p79
      %p81 = scmp.ne.s32.totalorder %s69, %s70
      %p82 = scmp.eq.s32.totalorder %s18, 3
      %p83 = por %p81, %p82
      %p85 = scmp.ne.s32.totalorder %s70, %s84
      %p86 = scmp.eq.s32.totalorder %s18, 0
      %p87 = por %p85, %p86
      %s88 = ssub.s32 %s12, %s19
      %p89 = scmp.eq.s32.totalorder %s88, 0
      %s91 = sadd.s32 %s90, 1
      %s92 = scalar_select %p89, %s90, %s91
      %p95 = pneg %p89
      %p96 = scmp.eq.s32.totalorder %s12, 3
      %p97 = por %p95, %p96
      %p98 = scmp.ne.s32.totalorder %s90, %s93
      %p99 = scmp.eq.s32.totalorder %s12, 0
      %p100 = por %p98, %p99
      %p101 = scmp.ne.s32.totalorder %s90, %s93
      %p102 = scmp.eq.s32.totalorder %s17, 3
      %p103 = por %p101, %p102
      %p104 = scmp.ne.s32.totalorder %s93, %s94
      %p105 = scmp.eq.s32.totalorder %s17, 0
      %p106 = por %p104, %p105
      %p107 = scmp.ne.s32.totalorder %s93, %s94
      %p108 = scmp.eq.s32.totalorder %s18, 3
      %p109 = por %p107, %p108
      %p111 = scmp.ne.s32.totalorder %s94, %s110
      %p112 = scmp.eq.s32.totalorder %s18, 0
      %p113 = por %p111, %p112
      %p114 = scmp.le.s32.totalorder 1, %s12
      %p115 = scmp.lt.s32.totalorder %s12, 5
      %p116 = pnand %p114, %p115
      %p117 = pneg %p116
      // Predicated region
      $region9: #{tpu_custom_call.1} parent=5 // pred_check
        _
      $region10: #{tpu_custom_call.1} parent=5 // pred_check_branch
        %119 = sbr.rel (%p116) target = $region12
      $region11: #{tpu_custom_call.1} parent=5 // pred_region
        %s120 = ssub.s32 %s12, 1
        // Predicated region
        $region13: #{tpu_custom_call.1} parent=11 // pred_check
          %p121 = pneg %p59
        $region14: #{tpu_custom_call.1} parent=11 // pred_check_branch
          %123 = sbr.rel (%p121) target = $region16
        $region15: #{tpu_custom_call.1} parent=11 // pred_region
          _
        $region16: #{tpu_custom_call.1} parent=11 // pred_fallthru
          _
        // Predicated region
        $region17: #{tpu_custom_call.1} parent=11 // pred_check
          %p124 = pneg %p80
        $region18: #{tpu_custom_call.1} parent=11 // pred_check_branch
          %126 = sbr.rel (%p124) target = $region20
        $region19: #{tpu_custom_call.1} parent=11 // pred_region
          _
        $region20: #{tpu_custom_call.1} parent=11 // pred_fallthru
          _
      $region12: #{tpu_custom_call.1} parent=5 // pred_fallthru
        _
      %p127 = scmp.lt.s32.totalorder %s12, 4
      // Predicated region
      $region21: #{tpu_custom_call.1} parent=5 // pred_check
        %p128 = pneg %p127
      $region22: #{tpu_custom_call.1} parent=5 // pred_check_branch
        %130 = sbr.rel (%p128) target = $region24
      $region23: #{tpu_custom_call.1} parent=5 // pred_region
        // Predicated region
        $region25: #{tpu_custom_call.1} parent=23 // pred_check
          %p131 = pneg %p32
        $region26: #{tpu_custom_call.1} parent=23 // pred_check_branch
          %133 = sbr.rel (%p131) target = $region28
        $region27: #{tpu_custom_call.1} parent=23 // pred_region
          %p134 = scmp.lt.s32.totalorder %s12, 3
          %s135 = scalar_select %p134, %s12, 3
          %s136 = smul.addr %s135, 2
          %s137 = scalar_lea.vmem %s0, %s136
        $region28: #{tpu_custom_call.1} parent=23 // pred_fallthru
          _
      $region24: #{tpu_custom_call.1} parent=5 // pred_fallthru
        _
      %p138 = scmp.le.s32.totalorder 1, %s12
      %p139 = scmp.lt.s32.totalorder %s12, 5
      %p140 = pnand %p138, %p139
      %p141 = pneg %p140
      // Predicated region
      $region29: #{tpu_custom_call.1} parent=5 // pred_check
        _
      $region30: #{tpu_custom_call.1} parent=5 // pred_check_branch
        %143 = sbr.rel (%p140) target = $region32
      $region31: #{tpu_custom_call.1} parent=5 // pred_region
        %s144 = ssub.s32 %s12, 1
        %p145 = scmp.lt.s32.totalorder %s17, 3
        %s146 = scalar_select %p145, %s17, 3
        %s147 = smul.addr %s146, 2
        %s148 = scalar_lea.vmem %s0, %s147
        %p149 = pneg %p38
        %p150 = pneg %p35
        %p151 = pneg %p59
        %p152 = pneg %p56
        %p153 = pneg %p80
        %p154 = pneg %p77
        %p155 = pneg %p106
        %p156 = pneg %p103
        %s157 = sand.u32 %s93, 1
        %s158 = scalar_lea.sflag [#allocation3], %s157
        %s159 = sand.u32 %s93, 1
        %s160 = smul.addr %s159, 16
        %s161 = scalar_lea.vmem [#allocation2], %s160
        %p162 = scmp.lt.s32.totalorder %s17, 3
        %s163 = scalar_select %p162, %s17, 3
        %s164 = smul.addr %s163, 2
        %s165 = scalar_lea.vmem %s0, %s164
        %v167 = vld [vmem:[%s165] sm:$0x3]
        %v168 = vld [vmem:[%s1] sm:$0xf]
        %v169 = vld [vmem:[%s1 + $0x4] sm:$0xf]
        %v170 = vld [vmem:[%s1 + $0x8] sm:$0xf]
        %v171 = vld [vmem:[%s1 + $0xc] sm:$0xf]
        %v176 = vunpack.c.l.b16 %v168
        %v177 = vunpack.c.l.b16 %v169
        %v178 = vunpack.c.l.b16 %v170
        %v179 = vunpack.c.l.b16 %v171
        %v180 = vpack.c.b16 %v177, %v176
        %v181 = vpack.c.b16 %v179, %v178
        %vm182 = vcmask 31744
        %v184 = vsel %vm182, %v180, 0
        %v187 = vsel %vm182, %v181, 0
        %vm189 = vcmask 1041408
        %v191 = vsel %vm189, %v167, 0
        %193 = vmatprep.subr.bf16.mxu0 0
        %194 = vmatpush1.bf16.msra.mxu0 %v191
        %195 = vmatprep.subr.bf16.mxu0 0
        %196 = vmatpush1.bf16.msra.mxu0 0
        %197 = vmatprep.subr.bf16.mxu0 0
        %198 = vmatpush1.bf16.msra.mxu0 0
        %199 = vmatprep.subr.bf16.mxu0 0
        %200 = vmatpush1.bf16.msra.mxu0 0
        %201 = vmatprep.subr.bf16.mxu0 0
        %202 = vmatpush1.bf16.msra.mxu0 0
        %203 = vmatprep.subr.bf16.mxu0 0
        %204 = vmatpush1.bf16.msra.mxu0 0
        %205 = vmatprep.subr.bf16.mxu0 0
        %206 = vmatpush1.bf16.msra.mxu0 0
        %207 = vmatprep.subr.bf16.mxu0 0
        %208 = vmatpush1.bf16.msra.mxu0 0
        %209 = vmatprep.subr.bf16.mxu0 0
        %210 = vmatpush1.bf16.msra.mxu0 0
        %211 = vmatprep.subr.bf16.mxu0 0
        %212 = vmatpush1.bf16.msra.mxu0 0
        %213 = vmatprep.subr.bf16.mxu0 0
        %214 = vmatpush1.bf16.msra.mxu0 0
        %215 = vmatprep.subr.bf16.mxu0 0
        %216 = vmatpush1.bf16.msra.mxu0 0
        %217 = vmatprep.subr.bf16.mxu0 0
        %218 = vmatpush1.bf16.msra.mxu0 0
        %219 = vmatprep.subr.bf16.mxu0 0
        %220 = vmatpush1.bf16.msra.mxu0 0
        %221 = vmatprep.subr.bf16.mxu0 0
        %222 = vmatpush1.bf16.msra.mxu0 0
        %223 = vmatprep.subr.bf16.mxu0 0
        %224 = vmatpush1.bf16.msra.mxu0 0
        %225 = vmatprep.mubr.bf16.mxu0 0
        %226 = vmatmul.mubr.bf16.gmra.mrb[0].mxu0 %v184
        %v227 = vpop.f32.mrb[0].mxu0
        %v228 = vadd.f32 0.0, %v227
        %v229 = vpop.f32.mrb[0].mxu0
        %v230 = vpop.f32.mrb[0].mxu0
        %v231 = vadd.f32 0.0, %v230
        %v232 = vpop.f32.mrb[0].mxu0
        %233 = vmatprep.mubr.bf16.mxu0 0
        %234 = vmatmul.mubr.bf16.gmra.mrb[0].mxu0 %v187
        %v235 = vpop.f32.mrb[0].mxu0
        %v236 = vadd.f32 0.0, %v235
        %v237 = vpop.f32.mrb[0].mxu0
        %v238 = vpop.f32.mrb[0].mxu0
        %v239 = vadd.f32 0.0, %v238
        %v240 = vpop.f32.mrb[0].mxu0
        %241 = vdwg.mxu0
        %v242 = vmax.f32 %v228, 0.0
        %v243 = vmax.f32 %v231, 0.0
        %v244 = vmax.f32 %v236, 0.0
        %v245 = vmax.f32 %v239, 0.0
        %v246 = vpack.c.bf16 %v243, %v242
        %v247 = vpack.c.bf16 %v245, %v244
        %v248 = vld [vmem:[%s2] sm:$0xf]
        %v249 = vld [vmem:[%s2 + $0x4] sm:$0xf]
        %v252 = vunpack.c.l.b16 %v248
        %v253 = vunpack.c.l.b16 %v249
        %v254 = vpack.c.b16 %v253, %v252
        %vm255 = vcmask 261120
        %v257 = vsel %vm255, %v254, 0
        %259 = vmatprep.subr.bf16.mxu0 0
        %260 = vmatpush1.bf16.msra.mxu0 %v246
        %261 = vmatprep.subr.bf16.mxu0 0
        %262 = vmatpush1.bf16.msra.mxu0 %v247
        %263 = vmatprep.subr.bf16.mxu0 0
        %264 = vmatpush1.bf16.msra.mxu0 0
        %265 = vmatprep.subr.bf16.mxu0 0
        %266 = vmatpush1.bf16.msra.mxu0 0
        %267 = vmatprep.subr.bf16.mxu0 0
        %268 = vmatpush1.bf16.msra.mxu0 0
        %269 = vmatprep.subr.bf16.mxu0 0
        %270 = vmatpush1.bf16.msra.mxu0 0
        %271 = vmatprep.subr.bf16.mxu0 0
        %272 = vmatpush1.bf16.msra.mxu0 0
        %273 = vmatprep.subr.bf16.mxu0 0
        %274 = vmatpush1.bf16.msra.mxu0 0
        %275 = vmatprep.subr.bf16.mxu0 0
        %276 = vmatpush1.bf16.msra.mxu0 0
        %277 = vmatprep.subr.bf16.mxu0 0
        %278 = vmatpush1.bf16.msra.mxu0 0
        %279 = vmatprep.subr.bf16.mxu0 0
        %280 = vmatpush1.bf16.msra.mxu0 0
        %281 = vmatprep.subr.bf16.mxu0 0
        %282 = vmatpush1.bf16.msra.mxu0 0
        %283 = vmatprep.subr.bf16.mxu0 0
        %284 = vmatpush1.bf16.msra.mxu0 0
        %285 = vmatprep.subr.bf16.mxu0 0
        %286 = vmatpush1.bf16.msra.mxu0 0
        %287 = vmatprep.subr.bf16.mxu0 0
        %288 = vmatpush1.bf16.msra.mxu0 0
        %289 = vmatprep.subr.bf16.mxu0 0
        %290 = vmatpush1.bf16.msra.mxu0 0
        %291 = vmatprep.mubr.bf16.mxu0 0
        %292 = vmatmul.mubr.bf16.gmra.mrb[0].mxu0 %v257
        %v293 = vpop.f32.mrb[0].mxu0
        %v294 = vadd.f32 0.0, %v293
        %v295 = vpop.f32.mrb[0].mxu0
        %v296 = vpop.f32.mrb[0].mxu0
        %v297 = vadd.f32 0.0, %v296
        %v298 = vpop.f32.mrb[0].mxu0
        %299 = vdwg.mxu0
        %v300 = vmax.f32 %v294, 0.0
        %v301 = vmax.f32 %v297, 0.0
        %302 = vst [vmem:[%s161] sm:$0xff] %v300
        %303 = vst [vmem:[%s161 + $0x8] sm:$0xff] %v301
        %s304 = sand.u32 %s93, 1
        %s305 = scalar_lea.sflag [#allocation3], %s304
        %s306 = sand.u32 %s93, 1
        %s307 = smul.addr %s306, 16
        %s308 = scalar_lea.vmem [#allocation2], %s307
        // Predicated region
        $region33: #{tpu_custom_call.1} parent=31 // pred_check
          %p309 = pneg %p103
        $region34: #{tpu_custom_call.1} parent=31 // pred_check_branch
          %311 = sbr.rel (%p309) target = $region36
        $region35: #{tpu_custom_call.1} parent=31 // pred_region
          %s313 = ssub.s32 256, 256
          %314 = vsyncadd %s305, %s313
          %s315 = smul.addr %s17, 128
          %s316 = scalar_lea.hbm %s3, %s315
          %s317 = sshll.u32 %s308, 4
          %s318 = int_to_ptr.vmem [resolvable:$true] %s317
          %323 = dma.vmem_to_hbm [thread:$0]  %s318, 256, %s316, %s305, 128, 512, 8
        $region36: #{tpu_custom_call.1} parent=31 // pred_fallthru
          _
      $region32: #{tpu_custom_call.1} parent=5 // pred_fallthru
        _
      %p324 = scmp.le.s32.totalorder 2, %s12
      // Predicated region
      $region37: #{tpu_custom_call.1} parent=5 // pred_check
        %p325 = pneg %p324
      $region38: #{tpu_custom_call.1} parent=5 // pred_check_branch
        %327 = sbr.rel (%p325) target = $region40
      $region39: #{tpu_custom_call.1} parent=5 // pred_region
        %s328 = ssub.s32 %s12, 2
        // Predicated region
        $region41: #{tpu_custom_call.1} parent=39 // pred_check
          %p329 = pneg %p109
        $region42: #{tpu_custom_call.1} parent=39 // pred_check_branch
          %331 = sbr.rel (%p329) target = $region44
        $region43: #{tpu_custom_call.1} parent=39 // pred_region
          %s332 = sand.u32 %s94, 1
          %s333 = scalar_lea.sflag [#allocation3], %s332
          %s334 = sand.u32 %s94, 1
          %s335 = smul.addr %s334, 16
          %s336 = scalar_lea.vmem [#allocation2], %s335
          %337 = dma.done %s333, 256
        $region44: #{tpu_custom_call.1} parent=39 // pred_fallthru
          _
      $region40: #{tpu_custom_call.1} parent=5 // pred_fallthru
        _
    $region6: #{tpu_custom_call.1} parent=1 // loop_footer
      %s16 = sadd.s32 1, %s12
    $region7: #{tpu_custom_call.1} parent=1 // loop_footer_branch
      %11 = sbr.rel target = $region3
    $region8: #{tpu_custom_call.1} parent=1 // loop_exit
      _
    %338 = vsyncpa [#allocation3], 1
    %s339 = scalar_lea.sflag [#allocation3], 1
    %340 = vsyncpa %s339, 1

</llo_original>
